<compile_context>
chip_gen: v5e
topology: v5e:2x2
jax: 0.10.0
libtpu: 0.0.40
codegen_flags: <defaults>
</compile_context>

<pallas_src>
import functools
import math

import jax
import jax.numpy as jnp
from jax import lax
from jax.experimental import pallas as pl
from jax.experimental.pallas import tpu as pltpu


# ---------------------------------------------------------------------------
# Fused conv kernel: one (batch, output-row-tile) grid step.
# ---------------------------------------------------------------------------
def _conv_fused_kernel(x_ref, w_ref, o_ref, *, kh, kw, sh, sw, th, wout, cin, cout):
    # x_ref: (1, Hp, Wp, Cin)   bf16  full padded image for this batch element
    #                                 (constant index_map across the row axis ->
    #                                  DMA'd once per batch, VMEM-resident).
    # w_ref: (kh, kw, Cin, Cout) bf16 resident across the whole grid.
    # o_ref: (1, th, Wout, Cout) f32  one tile of output rows (true Cout, no pad).
    r = pl.program_id(1)
    row_base = r * (th * sh)

    acc = jnp.zeros((th * wout, cout), jnp.float32)
    for ky in range(kh):                                   # unrolled at trace time
        rows = x_ref[0, pl.ds(row_base + ky, th * sh), :, :]   # (th*sh, Wp, Cin)
        if sh > 1:
            # TODO(synk): strided-height path uses reshape/select; the stride-1
            # example below does not exercise it.
            rows = rows.reshape(th, sh, rows.shape[1], cin)[:, 0]
        for kx in range(kw):
            cols = rows[:, kx:kx + wout * sw, :]               # (th, wout*sw, Cin)
            if sw > 1:
                cols = cols.reshape(th, wout, sw, cin)[:, :, 0]
            lhs = cols.reshape(th * wout, cin)                 # (th*wout, Cin)
            acc = acc + jnp.dot(lhs, w_ref[ky, kx],
                                preferred_element_type=jnp.float32)
    o_ref[...] = acc.reshape(1, th, wout, cout).astype(o_ref.dtype)


# ---------------------------------------------------------------------------
# Wrapper helpers
# ---------------------------------------------------------------------------
def _pick_row_tile(hout, batch, wout, cout, target_steps=8,
                   max_out_block_bytes=2 * 1024 * 1024):
    """Largest output-row tile that still yields >= target grid steps (pipeline
    overlap / megacore balance) while minimizing Hout padding waste."""
    best_th, best_key = 1, None
    min_steps = min(target_steps, batch * hout)
    for th in range(1, hout + 1):
        n_h = -(-hout // th)
        if batch * n_h < min_steps:
            continue
        if th * wout * cout * 4 > max_out_block_bytes:
            continue
        waste = n_h * th - hout
        key = (waste, -th)               # minimize padding waste, then maximize th
        if best_key is None or key < best_key:
            best_th, best_key = th, key
    return best_th


def _vmem_limit_bytes():
    """Generation-aware VMEM limit (v5e/v6e: 128 MiB phys, v7x: 64 MiB)."""
    try:
        cap = pltpu.get_tpu_info().vmem_capacity_bytes
    except Exception:
        cap = 64 * 1024 * 1024
    return int(min(cap * 3 // 4, 96 * 1024 * 1024))


def conv2d_pallas(x_nhwc, w_hwio, stride=(1, 1), padding=(0, 0)):
    """x: (B, H, W, Cin) f32, w: (kh, kw, Cin, Cout) f32 -> (B, Hout, Wout, Cout) f32."""
    B, H, W, Cin = x_nhwc.shape
    kh, kw, _, Cout = w_hwio.shape
    sh, sw = stride
    ph, pw = padding
    Hout = (H + 2 * ph - kh) // sh + 1
    Wout = (W + 2 * pw - kw) // sw + 1

    th = _pick_row_tile(Hout, B, Wout, Cout)
    n_h = -(-Hout // th)
    Hout_pad = n_h * th

    # Kernel reads rows [r*th*sh + ky, ... + th*sh) and cols [kx, kx + Wout*sw):
    # pad the image (zeros) so even the last (possibly padded) tile stays in bounds.
    Hp = max(H + 2 * ph, Hout_pad * sh + kh - 1)
    Wp = max(W + 2 * pw, Wout * sw + kw - 1)

    xp = jnp.pad(x_nhwc.astype(jnp.bfloat16),
                 ((0, 0), (ph, Hp - H - ph), (pw, Wp - W - pw), (0, 0)))
    wb = w_hwio.astype(jnp.bfloat16)          # (kh, kw, Cin, Cout), kept resident

    kern = functools.partial(_conv_fused_kernel, kh=kh, kw=kw, sh=sh, sw=sw,
                             th=th, wout=Wout, cin=Cin, cout=Cout)

    cost = pl.CostEstimate(
        flops=2 * B * Hout_pad * Wout * kh * kw * Cin * Cout,
        transcendentals=0,
        bytes_accessed=(B * Hp * Wp * Cin * 2          # input read once
                        + kh * kw * Cin * Cout * 2     # resident weights
                        + B * Hout_pad * Wout * Cout * 4))

    out = pl.pallas_call(
        kern,
        out_shape=jax.ShapeDtypeStruct((B, Hout_pad, Wout, Cout), jnp.float32),
        grid=(B, n_h),
        in_specs=[
            # Full padded image; index constant along the row axis -> fetched
            # once per batch element and reused across all row tiles.
            pl.BlockSpec((1, Hp, Wp, Cin), lambda b, r: (b, 0, 0, 0)),
            # Weights resident across the whole grid.
            pl.BlockSpec((kh, kw, Cin, Cout), lambda b, r: (0, 0, 0, 0)),
        ],
        out_specs=pl.BlockSpec((1, th, Wout, Cout), lambda b, r: (b, r, 0, 0)),
        compiler_params=pltpu.CompilerParams(
            dimension_semantics=("parallel", "parallel"),
            vmem_limit_bytes=_vmem_limit_bytes()),
        cost_estimate=cost,
    )(xp, wb)

    return out[:, :Hout]                      # drop padded output rows


def basic_block_forward(x_nchw, weight_oihw, stride=(1, 1), padding=(0, 0)):
    """PyTorch BasicBlock.forward: bias-free Conv2d.  NCHW in / NCHW out."""
    x_nhwc = jnp.transpose(x_nchw, (0, 2, 3, 1))
    w_hwio = jnp.transpose(weight_oihw, (2, 3, 1, 0))
    y_nhwc = conv2d_pallas(x_nhwc, w_hwio, stride, padding)
    return jnp.transpose(y_nhwc, (0, 3, 1, 2))


# ---------------------------------------------------------------------------
# Parameter init: BasicBlock.init_weights() calls nn.init.kaiming_uniform_
# with its DEFAULT a=0  ->  bound = sqrt(2) * sqrt(3 / fan_in) = sqrt(6/fan_in).
# (This intentionally mirrors the module's explicit init, not Conv2d's
#  reset_parameters default of a=sqrt(5).)
# ---------------------------------------------------------------------------
def kaiming_uniform_oihw(key, shape):
    _, cin, kh, kw = shape
    fan_in = cin * kh * kw
    bound = math.sqrt(2.0) * math.sqrt(3.0 / fan_in)
    return jax.random.uniform(key, shape, jnp.float32, -bound, bound)


# ---------------------------------------------------------------------------
if __name__ == "__main__":
    batch, in_channels, out_channels = 2, 4, 32
    H = W = 16
    kernel_size, stride, padding = 3, 1, 1      # BasicBlock(4, 32, 3, 1, 1)

    key = jax.random.PRNGKey(0)
    k_x, k_w = jax.random.split(key)
    x = jax.random.normal(k_x, (batch, in_channels, H, W), jnp.float32)
    w = kaiming_uniform_oihw(k_w, (out_channels, in_channels,
                                   kernel_size, kernel_size))

    fwd = jax.jit(functools.partial(basic_block_forward,
                                    stride=(stride, stride),
                                    padding=(padding, padding)))
    out = fwd(x, w)
    jax.block_until_ready(out)

    Hout = (H + 2 * padding - kernel_size) // stride + 1
    Wout = (W + 2 * padding - kernel_size) // stride + 1
    assert out.shape == (batch, out_channels, Hout, Wout), out.shape

    # Sanity check against XLA's conv on the same bf16-rounded operands.
    # (Kernel uses bf16 operands with f32 accumulation -> tiny deviation from a
    #  pure-f32 PyTorch conv; documented and within tolerance.)
    ref = lax.conv_general_dilated(
        x.astype(jnp.bfloat16).astype(jnp.float32),
        w.astype(jnp.bfloat16).astype(jnp.float32),
        window_strides=(stride, stride),
        padding=((padding, padding), (padding, padding)),
        dimension_numbers=("NCHW", "OIHW", "NCHW"),
        precision=lax.Precision.HIGHEST)
    max_err = float(jnp.max(jnp.abs(out - ref)))
    assert max_err < 2e-2, f"max abs error {max_err}"

    print("KERNEL_OK")
</pallas_src>

<mosaic_0001>
module attributes {stable_mosaic.version = 11 : i64} {
  func.func @_conv_fused_kernel(%arg0: i32, %arg1: i32, %arg2: memref<1x18x18x4xbf16, #tpu.memory_space<vmem>>, %arg3: memref<3x3x4x32xbf16, #tpu.memory_space<vmem>>, %arg4: memref<1x4x16x32xf32, #tpu.memory_space<vmem>>) attributes {dimension_semantics = [#tpu.dimension_semantics<parallel>, #tpu.dimension_semantics<parallel>], iteration_bounds = array<i64: 2, 4>, scalar_prefetch = 0 : i64, scratch_operands = 0 : i64, tpu.core_type = #tpu.core_type<tc>, window_params = [{transform_indices = @transform_0, window_bounds = array<i64: 1, 18, 18, 4>}, {pipeline_mode = #tpu.pipeline_mode<synchronous>, transform_indices = @transform_1, window_bounds = array<i64: 3, 3, 4, 32>}, {transform_indices = @transform_2, window_bounds = array<i64: 1, 4, 16, 32>}]} {
    %c4_i32 = arith.constant 4 : i32
    %0 = arith.muli %arg1, %c4_i32 : i32
    %cst = arith.constant 0.000000e+00 : f32
    %1 = vector.broadcast %cst : f32 to vector<64x32xf32>
    %c0_i32 = arith.constant 0 : i32
    %2 = arith.addi %0, %c0_i32 : i32
    %c0 = arith.constant 0 : index
    %3 = arith.index_cast %2 : i32 to index
    %c0_0 = arith.constant 0 : index
    %c0_1 = arith.constant 0 : index
    %4 = vector.load %arg2[%c0, %3, %c0_0, %c0_1] : memref<1x18x18x4xbf16, #tpu.memory_space<vmem>>, vector<1x4x18x4xbf16>
    %5 = vector.shape_cast %4 : vector<1x4x18x4xbf16> to vector<4x18x4xbf16>
    %6 = vector.extract_strided_slice %5 {offsets = [0, 0, 0], sizes = [4, 16, 4], strides = [1, 1, 1]} : vector<4x18x4xbf16> to vector<4x16x4xbf16>
    %7 = vector.shape_cast %6 : vector<4x16x4xbf16> to vector<64x4xbf16>
    %c0_2 = arith.constant 0 : index
    %c0_3 = arith.constant 0 : index
    %c0_4 = arith.constant 0 : index
    %c0_5 = arith.constant 0 : index
    %8 = vector.load %arg3[%c0_2, %c0_3, %c0_4, %c0_5] : memref<3x3x4x32xbf16, #tpu.memory_space<vmem>>, vector<1x1x4x32xbf16>
    %9 = vector.shape_cast %8 : vector<1x1x4x32xbf16> to vector<4x32xbf16>
    %cst_6 = arith.constant dense<0.000000e+00> : vector<64x32xf32>
    %10 = tpu.matmul %7, %9, %cst_6 {dimension_numbers = #tpu.dot_dimension_numbers<[1], [0], [0], [1], [0, 0, 1, 1], [], []>} : vector<64x4xbf16>, vector<4x32xbf16>, vector<64x32xf32> -> vector<64x32xf32>
    %11 = arith.addf %1, %10 : vector<64x32xf32>
    %12 = vector.extract_strided_slice %5 {offsets = [0, 1, 0], sizes = [4, 16, 4], strides = [1, 1, 1]} : vector<4x18x4xbf16> to vector<4x16x4xbf16>
    %13 = vector.shape_cast %12 : vector<4x16x4xbf16> to vector<64x4xbf16>
    %c0_7 = arith.constant 0 : index
    %c1 = arith.constant 1 : index
    %c0_8 = arith.constant 0 : index
    %c0_9 = arith.constant 0 : index
    %14 = vector.load %arg3[%c0_7, %c1, %c0_8, %c0_9] : memref<3x3x4x32xbf16, #tpu.memory_space<vmem>>, vector<1x1x4x32xbf16>
    %15 = vector.shape_cast %14 : vector<1x1x4x32xbf16> to vector<4x32xbf16>
    %cst_10 = arith.constant dense<0.000000e+00> : vector<64x32xf32>
    %16 = tpu.matmul %13, %15, %cst_10 {dimension_numbers = #tpu.dot_dimension_numbers<[1], [0], [0], [1], [0, 0, 1, 1], [], []>} : vector<64x4xbf16>, vector<4x32xbf16>, vector<64x32xf32> -> vector<64x32xf32>
    %17 = arith.addf %11, %16 : vector<64x32xf32>
    %18 = vector.extract_strided_slice %5 {offsets = [0, 2, 0], sizes = [4, 16, 4], strides = [1, 1, 1]} : vector<4x18x4xbf16> to vector<4x16x4xbf16>
    %19 = vector.shape_cast %18 : vector<4x16x4xbf16> to vector<64x4xbf16>
    %c0_11 = arith.constant 0 : index
    %c2 = arith.constant 2 : index
    %c0_12 = arith.constant 0 : index
    %c0_13 = arith.constant 0 : index
    %20 = vector.load %arg3[%c0_11, %c2, %c0_12, %c0_13] : memref<3x3x4x32xbf16, #tpu.memory_space<vmem>>, vector<1x1x4x32xbf16>
    %21 = vector.shape_cast %20 : vector<1x1x4x32xbf16> to vector<4x32xbf16>
    %cst_14 = arith.constant dense<0.000000e+00> : vector<64x32xf32>
    %22 = tpu.matmul %19, %21, %cst_14 {dimension_numbers = #tpu.dot_dimension_numbers<[1], [0], [0], [1], [0, 0, 1, 1], [], []>} : vector<64x4xbf16>, vector<4x32xbf16>, vector<64x32xf32> -> vector<64x32xf32>
    %23 = arith.addf %17, %22 : vector<64x32xf32>
    %c1_i32 = arith.constant 1 : i32
    %24 = arith.addi %0, %c1_i32 : i32
    %c0_15 = arith.constant 0 : index
    %25 = arith.index_cast %24 : i32 to index
    %c0_16 = arith.constant 0 : index
    %c0_17 = arith.constant 0 : index
    %26 = vector.load %arg2[%c0_15, %25, %c0_16, %c0_17] : memref<1x18x18x4xbf16, #tpu.memory_space<vmem>>, vector<1x4x18x4xbf16>
    %27 = vector.shape_cast %26 : vector<1x4x18x4xbf16> to vector<4x18x4xbf16>
    %28 = vector.extract_strided_slice %27 {offsets = [0, 0, 0], sizes = [4, 16, 4], strides = [1, 1, 1]} : vector<4x18x4xbf16> to vector<4x16x4xbf16>
    %29 = vector.shape_cast %28 : vector<4x16x4xbf16> to vector<64x4xbf16>
    %c1_18 = arith.constant 1 : index
    %c0_19 = arith.constant 0 : index
    %c0_20 = arith.constant 0 : index
    %c0_21 = arith.constant 0 : index
    %30 = vector.load %arg3[%c1_18, %c0_19, %c0_20, %c0_21] : memref<3x3x4x32xbf16, #tpu.memory_space<vmem>>, vector<1x1x4x32xbf16>
    %31 = vector.shape_cast %30 : vector<1x1x4x32xbf16> to vector<4x32xbf16>
    %cst_22 = arith.constant dense<0.000000e+00> : vector<64x32xf32>
    %32 = tpu.matmul %29, %31, %cst_22 {dimension_numbers = #tpu.dot_dimension_numbers<[1], [0], [0], [1], [0, 0, 1, 1], [], []>} : vector<64x4xbf16>, vector<4x32xbf16>, vector<64x32xf32> -> vector<64x32xf32>
    %33 = arith.addf %23, %32 : vector<64x32xf32>
    %34 = vector.extract_strided_slice %27 {offsets = [0, 1, 0], sizes = [4, 16, 4], strides = [1, 1, 1]} : vector<4x18x4xbf16> to vector<4x16x4xbf16>
    %35 = vector.shape_cast %34 : vector<4x16x4xbf16> to vector<64x4xbf16>
    %c1_23 = arith.constant 1 : index
    %c1_24 = arith.constant 1 : index
    %c0_25 = arith.constant 0 : index
    %c0_26 = arith.constant 0 : index
    %36 = vector.load %arg3[%c1_23, %c1_24, %c0_25, %c0_26] : memref<3x3x4x32xbf16, #tpu.memory_space<vmem>>, vector<1x1x4x32xbf16>
    %37 = vector.shape_cast %36 : vector<1x1x4x32xbf16> to vector<4x32xbf16>
    %cst_27 = arith.constant dense<0.000000e+00> : vector<64x32xf32>
    %38 = tpu.matmul %35, %37, %cst_27 {dimension_numbers = #tpu.dot_dimension_numbers<[1], [0], [0], [1], [0, 0, 1, 1], [], []>} : vector<64x4xbf16>, vector<4x32xbf16>, vector<64x32xf32> -> vector<64x32xf32>
    %39 = arith.addf %33, %38 : vector<64x32xf32>
    %40 = vector.extract_strided_slice %27 {offsets = [0, 2, 0], sizes = [4, 16, 4], strides = [1, 1, 1]} : vector<4x18x4xbf16> to vector<4x16x4xbf16>
    %41 = vector.shape_cast %40 : vector<4x16x4xbf16> to vector<64x4xbf16>
    %c1_28 = arith.constant 1 : index
    %c2_29 = arith.constant 2 : index
    %c0_30 = arith.constant 0 : index
    %c0_31 = arith.constant 0 : index
    %42 = vector.load %arg3[%c1_28, %c2_29, %c0_30, %c0_31] : memref<3x3x4x32xbf16, #tpu.memory_space<vmem>>, vector<1x1x4x32xbf16>
    %43 = vector.shape_cast %42 : vector<1x1x4x32xbf16> to vector<4x32xbf16>
    %cst_32 = arith.constant dense<0.000000e+00> : vector<64x32xf32>
    %44 = tpu.matmul %41, %43, %cst_32 {dimension_numbers = #tpu.dot_dimension_numbers<[1], [0], [0], [1], [0, 0, 1, 1], [], []>} : vector<64x4xbf16>, vector<4x32xbf16>, vector<64x32xf32> -> vector<64x32xf32>
    %45 = arith.addf %39, %44 : vector<64x32xf32>
    %c2_i32 = arith.constant 2 : i32
    %46 = arith.addi %0, %c2_i32 : i32
    %c0_33 = arith.constant 0 : index
    %47 = arith.index_cast %46 : i32 to index
    %c0_34 = arith.constant 0 : index
    %c0_35 = arith.constant 0 : index
    %48 = vector.load %arg2[%c0_33, %47, %c0_34, %c0_35] : memref<1x18x18x4xbf16, #tpu.memory_space<vmem>>, vector<1x4x18x4xbf16>
    %49 = vector.shape_cast %48 : vector<1x4x18x4xbf16> to vector<4x18x4xbf16>
    %50 = vector.extract_strided_slice %49 {offsets = [0, 0, 0], sizes = [4, 16, 4], strides = [1, 1, 1]} : vector<4x18x4xbf16> to vector<4x16x4xbf16>
    %51 = vector.shape_cast %50 : vector<4x16x4xbf16> to vector<64x4xbf16>
    %c2_36 = arith.constant 2 : index
    %c0_37 = arith.constant 0 : index
    %c0_38 = arith.constant 0 : index
    %c0_39 = arith.constant 0 : index
    %52 = vector.load %arg3[%c2_36, %c0_37, %c0_38, %c0_39] : memref<3x3x4x32xbf16, #tpu.memory_space<vmem>>, vector<1x1x4x32xbf16>
    %53 = vector.shape_cast %52 : vector<1x1x4x32xbf16> to vector<4x32xbf16>
    %cst_40 = arith.constant dense<0.000000e+00> : vector<64x32xf32>
    %54 = tpu.matmul %51, %53, %cst_40 {dimension_numbers = #tpu.dot_dimension_numbers<[1], [0], [0], [1], [0, 0, 1, 1], [], []>} : vector<64x4xbf16>, vector<4x32xbf16>, vector<64x32xf32> -> vector<64x32xf32>
    %55 = arith.addf %45, %54 : vector<64x32xf32>
    %56 = vector.extract_strided_slice %49 {offsets = [0, 1, 0], sizes = [4, 16, 4], strides = [1, 1, 1]} : vector<4x18x4xbf16> to vector<4x16x4xbf16>
    %57 = vector.shape_cast %56 : vector<4x16x4xbf16> to vector<64x4xbf16>
    %c2_41 = arith.constant 2 : index
    %c1_42 = arith.constant 1 : index
    %c0_43 = arith.constant 0 : index
    %c0_44 = arith.constant 0 : index
    %58 = vector.load %arg3[%c2_41, %c1_42, %c0_43, %c0_44] : memref<3x3x4x32xbf16, #tpu.memory_space<vmem>>, vector<1x1x4x32xbf16>
    %59 = vector.shape_cast %58 : vector<1x1x4x32xbf16> to vector<4x32xbf16>
    %cst_45 = arith.constant dense<0.000000e+00> : vector<64x32xf32>
    %60 = tpu.matmul %57, %59, %cst_45 {dimension_numbers = #tpu.dot_dimension_numbers<[1], [0], [0], [1], [0, 0, 1, 1], [], []>} : vector<64x4xbf16>, vector<4x32xbf16>, vector<64x32xf32> -> vector<64x32xf32>
    %61 = arith.addf %55, %60 : vector<64x32xf32>
    %62 = vector.extract_strided_slice %49 {offsets = [0, 2, 0], sizes = [4, 16, 4], strides = [1, 1, 1]} : vector<4x18x4xbf16> to vector<4x16x4xbf16>
    %63 = vector.shape_cast %62 : vector<4x16x4xbf16> to vector<64x4xbf16>
    %c2_46 = arith.constant 2 : index
    %c2_47 = arith.constant 2 : index
    %c0_48 = arith.constant 0 : index
    %c0_49 = arith.constant 0 : index
    %64 = vector.load %arg3[%c2_46, %c2_47, %c0_48, %c0_49] : memref<3x3x4x32xbf16, #tpu.memory_space<vmem>>, vector<1x1x4x32xbf16>
    %65 = vector.shape_cast %64 : vector<1x1x4x32xbf16> to vector<4x32xbf16>
    %cst_50 = arith.constant dense<0.000000e+00> : vector<64x32xf32>
    %66 = tpu.matmul %63, %65, %cst_50 {dimension_numbers = #tpu.dot_dimension_numbers<[1], [0], [0], [1], [0, 0, 1, 1], [], []>} : vector<64x4xbf16>, vector<4x32xbf16>, vector<64x32xf32> -> vector<64x32xf32>
    %67 = arith.addf %61, %66 : vector<64x32xf32>
    %68 = vector.shape_cast %67 : vector<64x32xf32> to vector<1x4x16x32xf32>
    %c0_51 = arith.constant 0 : index
    %c0_52 = arith.constant 0 : index
    %c0_53 = arith.constant 0 : index
    %c0_54 = arith.constant 0 : index
    %69 = vector.load %arg4[%c0_51, %c0_52, %c0_53, %c0_54] : memref<1x4x16x32xf32, #tpu.memory_space<vmem>>, vector<1x4x16x32xf32>
    tpu.vector_store %arg4[%c0_51, %c0_52, %c0_53, %c0_54], %68 {strides = array<i32>} : memref<1x4x16x32xf32, #tpu.memory_space<vmem>>, vector<1x4x16x32xf32>,
    return
  }
  func.func @transform_0(%arg0: i32, %arg1: i32) -> (i32, i32, i32, i32) {
    %c0_i32 = arith.constant 0 : i32
    %c0_i32_0 = arith.constant 0 : i32
    %c0_i32_1 = arith.constant 0 : i32
    %c0_i32_2 = arith.constant 0 : i32
    return %arg0, %c0_i32, %c0_i32_0, %c0_i32_1 : i32, i32, i32, i32
  }
  func.func @transform_1(%arg0: i32, %arg1: i32) -> (i32, i32, i32, i32) {
    %c0_i32 = arith.constant 0 : i32
    %c0_i32_0 = arith.constant 0 : i32
    %c0_i32_1 = arith.constant 0 : i32
    %c0_i32_2 = arith.constant 0 : i32
    %c0_i32_3 = arith.constant 0 : i32
    return %c0_i32, %c0_i32_0, %c0_i32_1, %c0_i32_2 : i32, i32, i32, i32
  }
  func.func @transform_2(%arg0: i32, %arg1: i32) -> (i32, i32, i32, i32) {
    %c0_i32 = arith.constant 0 : i32
    %c0_i32_0 = arith.constant 0 : i32
    %c0_i32_1 = arith.constant 0 : i32
    return %arg0, %arg1, %c0_i32, %c0_i32_0 : i32, i32, i32, i32
  }
}

</mosaic_0001>

<llo_original>
// kernel: basic_block_forward.1
$region0: #{basic_block_forward.1}
  #allocation0 [shape = 'u32[]', space=smem, size = 0x4, offset = 0x4, fixed_abs, tag = 'smem constant byte address 0x4 - core index']
  #allocation1 [shape = 'u32[72,128]{1,0:T(1,128)}', space=vmem, size = 0x9000, scoped, tag = 'internal scratch']
  %s0 = inlined_call_operand.vmem [shape: bf16[2,18,18,4], index: 0, kind: input, shape index: {}]
  %s1 = inlined_call_operand.vmem [shape: bf16[3,3,4,32], index: 1, kind: input, shape index: {}]
  %s2 = inlined_call_operand.hbm [shape: f32[2,16,16,32], index: 2, kind: output, shape index: {}]
  %s3 = sld [smem:[#allocation0]]
  $region41: #{basic_block_forward.1} parent=0
    _
  %s5 = ssub.s32 1, %s3
  %s6 = scalar_select 0, %s5, %s3
  $region1: #{basic_block_forward.1} parent=0
    #allocation2 [shape = 'u8[65536]{0}', space=vmem, size = 0x10000, scoped, tag = 'output window, operand 0']
    #allocation3 [shape = 's32[2]{0}', space=sflag, size = 0x8, scoped, tag = 'scoped memory for basic_block_forward.1']
    %7 = vsyncpa [#allocation3], 0
    %s8 = scalar_lea.sflag [#allocation3], 1
    %9 = vsyncpa %s8, 0
    loop: start=0, step=1, limit=10
    $region2: #{basic_block_forward.1} parent=1 // loop_pre_header
      _
    $region3: #{basic_block_forward.1} parent=1 // loop_header
      %s11 = sphi 0, %s15
      %p12 = scmp.ge.s32.totalorder %s11, 10
      %s18 = sphi 0, %s30
      %s19 = sphi 0, %s26
      %s20 = sphi 0, %s18
      %s21 = sphi 0, %s19
      %s22 = sphi 0, %s20
      %s23 = sphi 0, %s21
      %s33 = sphi 0, %s35
      %s36 = sphi 0, %s33
      %s37 = sphi 0, %s36
      %s53 = sphi 0, %s37
      %s57 = sphi 0, %s57
      %s59 = sphi 0, %s57
      %s60 = sphi 0, %s59
      %s74 = sphi 0, %s60
      %s82 = sphi 0, %s84
      %s85 = sphi 0, %s82
      %s86 = sphi 0, %s85
      %s102 = sphi 0, %s86
    $region4: #{basic_block_forward.1} parent=1 // loop_header_branch
      %14 = sbr.rel (%p12) target = $region8
    $region5: #{basic_block_forward.1} parent=1 // loop_body
      %s16 = ssub.s32 %s11, 1
      %s17 = ssub.s32 %s11, 2
      %s24 = sadd.s32 1, %s19
      %p25 = scmp.ge.s32.totalorder %s24, 4
      %s26 = scalar_select %p25, 0, %s24
      %s27 = sadd.s32 1, %s18
      %s28 = scalar_select %p25, %s27, %s18
      %p29 = scmp.ge.s32.totalorder %s28, 2
      %s30 = scalar_select %p29, 0, %s28
      %s31 = ssub.s32 %s18, %s30
      %p32 = scmp.eq.s32.totalorder %s31, 0
      %s34 = sadd.s32 %s33, 1
      %s35 = scalar_select %p32, %s33, %s34
      %p38 = pneg %p32
      %p39 = scmp.eq.s32.totalorder %s11, 7
      %p40 = por %p38, %p39
      %p41 = scmp.ne.s32.totalorder %s33, %s36
      %p42 = scmp.eq.s32.totalorder %s11, 0
      %p43 = por %p41, %p42
      %p44 = scmp.ne.s32.totalorder %s33, %s36
      %p45 = scmp.eq.s32.totalorder %s16, 7
      %p46 = por %p44, %p45
      %p47 = scmp.ne.s32.totalorder %s36, %s37
      %p48 = scmp.eq.s32.totalorder %s16, 0
      %p49 = por %p47, %p48
      %p50 = scmp.ne.s32.totalorder %s36, %s37
      %p51 = scmp.eq.s32.totalorder %s17, 7
      %p52 = por %p50, %p51
      %p54 = scmp.ne.s32.totalorder %s37, %s53
      %p55 = scmp.eq.s32.totalorder %s17, 0
      %p56 = por %p54, %p55
      %s58 = sadd.s32 %s57, 1
      %p61 = scmp.eq.s32.totalorder %s11, 7
      %p62 = scmp.ne.s32.totalorder %s57, %s59
      %p63 = scmp.eq.s32.totalorder %s11, 0
      %p64 = por %p62, %p63
      %p65 = scmp.ne.s32.totalorder %s57, %s59
      %p66 = scmp.eq.s32.totalorder %s16, 7
      %p67 = por %p65, %p66
      %p68 = scmp.ne.s32.totalorder %s59, %s60
      %p69 = scmp.eq.s32.totalorder %s16, 0
      %p70 = por %p68, %p69
      %p71 = scmp.ne.s32.totalorder %s59, %s60
      %p72 = scmp.eq.s32.totalorder %s17, 7
      %p73 = por %p71, %p72
      %p75 = scmp.ne.s32.totalorder %s60, %s74
      %p76 = scmp.eq.s32.totalorder %s17, 0
      %p77 = por %p75, %p76
      %s78 = ssub.s32 %s18, %s30
      %s79 = ssub.s32 %s19, %s26
      %s80 = sor.u32 %s78, %s79
      %p81 = scmp.eq.s32.totalorder %s80, 0
      %s83 = sadd.s32 %s82, 1
      %s84 = scalar_select %p81, %s82, %s83
      %p87 = pneg %p81
      %p88 = scmp.eq.s32.totalorder %s11, 7
      %p89 = por %p87, %p88
      %p90 = scmp.ne.s32.totalorder %s82, %s85
      %p91 = scmp.eq.s32.totalorder %s11, 0
      %p92 = por %p90, %p91
      %p93 = scmp.ne.s32.totalorder %s82, %s85
      %p94 = scmp.eq.s32.totalorder %s16, 7
      %p95 = por %p93, %p94
      %p96 = scmp.ne.s32.totalorder %s85, %s86
      %p97 = scmp.eq.s32.totalorder %s16, 0
      %p98 = por %p96, %p97
      %p99 = scmp.ne.s32.totalorder %s85, %s86
      %p100 = scmp.eq.s32.totalorder %s17, 7
      %p101 = por %p99, %p100
      %p103 = scmp.ne.s32.totalorder %s86, %s102
      %p104 = scmp.eq.s32.totalorder %s17, 0
      %p105 = por %p103, %p104
      %p106 = scmp.le.s32.totalorder 1, %s11
      %p107 = scmp.lt.s32.totalorder %s11, 9
      %p108 = pnand %p106, %p107
      %p109 = pneg %p108
      // Predicated region
      $region9: #{basic_block_forward.1} parent=5 // pred_check
        _
      $region10: #{basic_block_forward.1} parent=5 // pred_check_branch
        %111 = sbr.rel (%p108) target = $region12
      $region11: #{basic_block_forward.1} parent=5 // pred_region
        %s112 = ssub.s32 %s11, 1
        // Predicated region
        $region13: #{basic_block_forward.1} parent=11 // pred_check
          %p113 = pneg %p70
        $region14: #{basic_block_forward.1} parent=11 // pred_check_branch
          %115 = sbr.rel (%p113) target = $region16
        $region15: #{basic_block_forward.1} parent=11 // pred_region
          _
        $region16: #{basic_block_forward.1} parent=11 // pred_fallthru
          _
      $region12: #{basic_block_forward.1} parent=5 // pred_fallthru
        _
      %p116 = scmp.lt.s32.totalorder %s11, 8
      // Predicated region
      $region17: #{basic_block_forward.1} parent=5 // pred_check
        %p117 = pneg %p116
      $region18: #{basic_block_forward.1} parent=5 // pred_check_branch
        %119 = sbr.rel (%p117) target = $region20
      $region19: #{basic_block_forward.1} parent=5 // pred_region
        // Predicated region
        $region21: #{basic_block_forward.1} parent=19 // pred_check
          %p120 = pneg %p43
        $region22: #{basic_block_forward.1} parent=19 // pred_check_branch
          %122 = sbr.rel (%p120) target = $region24
        $region23: #{basic_block_forward.1} parent=19 // pred_region
          %p123 = scmp.lt.s32.totalorder %s18, 1
          %s124 = scalar_select %p123, %s18, 1
          %s125 = smul.addr %s124, 54
          %s126 = smul.addr %s125, 4
          %s127 = scalar_lea.vmem %s0, %s126
        $region24: #{basic_block_forward.1} parent=19 // pred_fallthru
          _
      $region20: #{basic_block_forward.1} parent=5 // pred_fallthru
        _
      %p128 = scmp.le.s32.totalorder 1, %s11
      %p129 = scmp.lt.s32.totalorder %s11, 9
      %p130 = pnand %p128, %p129
      %p131 = pneg %p130
      // Predicated region
      $region25: #{basic_block_forward.1} parent=5 // pred_check
        _
      $region26: #{basic_block_forward.1} parent=5 // pred_check_branch
        %133 = sbr.rel (%p130) target = $region28
      $region27: #{basic_block_forward.1} parent=5 // pred_region
        %s134 = ssub.s32 %s11, 1
        %p135 = scmp.lt.s32.totalorder %s20, 1
        %s136 = scalar_select %p135, %s20, 1
        %s137 = smul.addr %s136, 54
        %s138 = smul.addr %s137, 4
        %s139 = scalar_lea.vmem %s0, %s138
        %p140 = pneg %p49
        %p141 = pneg %p46
        %p142 = pneg %p70
        %p143 = pneg %p67
        %p144 = pneg %p98
        %p145 = pneg %p95
        %s146 = sand.u32 %s85, 1
        %s147 = scalar_lea.sflag [#allocation3], %s146
        %s148 = sand.u32 %s85, 1
        %s149 = smul.addr %s148, 64
        %s150 = scalar_lea.vmem [#allocation2], %s149
        %p151 = scmp.lt.s32.totalorder %s20, 1
        %s152 = scalar_select %p151, %s20, 1
        %s153 = smul.addr %s152, 54
        %s154 = smul.addr %s153, 4
        %s155 = scalar_lea.vmem %s0, %s154
        %s156 = smul.u32 4, %s21
        %s158 = smul.u32 %s21, 4
        %s159 = smul.u32 %s158, 3
        %s160 = smul.addr %s159, 4
        %s161 = scalar_lea.vmem %s155, %s160
        %v162 = vld [vmem:[%s161] sm:$0xf]
        %v163 = vld [vmem:[%s161 + $0x4] sm:$0xf]
        %v164 = vld [vmem:[%s161 + $0x8] sm:$0x1]
        %v165 = vld [vmem:[%s161 + $0xc] sm:$0xf]
        %v166 = vld [vmem:[%s161 + $0x10] sm:$0xf]
        %v167 = vld [vmem:[%s161 + $0x14] sm:$0x1]
        %v168 = vld [vmem:[%s161 + $0x18] sm:$0xf]
        %v169 = vld [vmem:[%s161 + $0x1c] sm:$0xf]
        %v170 = vld [vmem:[%s161 + $0x20] sm:$0x1]
        %v171 = vld [vmem:[%s161 + $0x24] sm:$0xf]
        %v172 = vld [vmem:[%s161 + $0x28] sm:$0xf]
        %v173 = vld [vmem:[%s161 + $0x2c] sm:$0x1]
        %v174 = vld [vmem:[%s1] sm:$0x3]
        %vm175 = vsmask.f32 3328
        %vm176 = vsmask.f32 7440
        %vm177 = vmor %vm175, %vm176
        %v179 = vshrl.u32 %v162, 16
        %v181 = vrot.slane %v179, 4
        %v182 = vshll.u32 %v162, 16
        %v184 = vrot.slane %v182, 5
        %v185 = vor.u32 %v181, %v184
        %v186 = vrot.slane %v185, 4
        %v188 = vshll.u32 %v163, 16
        %v190 = vrot.slane %v188, 5
        %v191 = vsel %vm177, %v186, %v190
        %v192 = vshrl.u32 %v163, 16
        %v194 = vrot.slane %v192, 4
        %v195 = vor.u32 %v194, %v190
        %v196 = vrot.slane %v195, 4
        %v198 = vshll.u32 %v164, 16
        %v200 = vrot.slane %v198, 5
        %v201 = vsel %vm177, %v196, %v200
        %v203 = vshrl.u32 %v165, 16
        %v205 = vrot.slane %v203, 4
        %v206 = vshll.u32 %v165, 16
        %v208 = vrot.slane %v206, 5
        %v209 = vor.u32 %v205, %v208
        %v210 = vrot.slane %v209, 4
        %v212 = vshll.u32 %v166, 16
        %v214 = vrot.slane %v212, 5
        %v215 = vsel %vm177, %v210, %v214
        %v216 = vshrl.u32 %v166, 16
        %v218 = vrot.slane %v216, 4
        %v219 = vor.u32 %v218, %v214
        %v220 = vrot.slane %v219, 4
        %v222 = vshll.u32 %v167, 16
        %v224 = vrot.slane %v222, 5
        %v225 = vsel %vm177, %v220, %v224
        %v227 = vshrl.u32 %v168, 16
        %v229 = vrot.slane %v227, 4
        %v230 = vshll.u32 %v168, 16
        %v232 = vrot.slane %v230, 5
        %v233 = vor.u32 %v229, %v232
        %v234 = vrot.slane %v233, 4
        %v236 = vshll.u32 %v169, 16
        %v238 = vrot.slane %v236, 5
        %v239 = vsel %vm177, %v234, %v238
        %v240 = vshrl.u32 %v169, 16
        %v242 = vrot.slane %v240, 4
        %v243 = vor.u32 %v242, %v238
        %v244 = vrot.slane %v243, 4
        %v246 = vshll.u32 %v170, 16
        %v248 = vrot.slane %v246, 5
        %v249 = vsel %vm177, %v244, %v248
        %v251 = vshrl.u32 %v171, 16
        %v253 = vrot.slane %v251, 4
        %v254 = vshll.u32 %v171, 16
        %v256 = vrot.slane %v254, 5
        %v257 = vor.u32 %v253, %v256
        %v258 = vrot.slane %v257, 4
        %v260 = vshll.u32 %v172, 16
        %v262 = vrot.slane %v260, 5
        %v263 = vsel %vm177, %v258, %v262
        %v264 = vshrl.u32 %v172, 16
        %v266 = vrot.slane %v264, 4
        %v267 = vor.u32 %v266, %v262
        %v268 = vrot.slane %v267, 4
        %v270 = vshll.u32 %v173, 16
        %v272 = vrot.slane %v270, 5
        %v273 = vsel %vm177, %v268, %v272
        %s274 = scalar_lea.vmem %s1, 2
        %v275 = vld [vmem:[%s274] sm:$0x3]
        %v276 = vunpack.c.l.b16 %v191
        %v277 = vunpack.c.l.b16 %v201
        %v278 = vunpack.c.l.b16 %v215
        %v279 = vunpack.c.l.b16 %v225
        %v280 = vunpack.c.l.b16 %v239
        %v281 = vunpack.c.l.b16 %v249
        %v282 = vunpack.c.l.b16 %v263
        %v283 = vunpack.c.l.b16 %v273
        %v284 = vpack.c.b16 %v277, %v276
        %v285 = vpack.c.b16 %v279, %v278
        %v286 = vpack.c.b16 %v281, %v280
        %v287 = vpack.c.b16 %v283, %v282
        %vm288 = vcmask 31744
        %v290 = vsel %vm288, %v284, 0
        %v293 = vsel %vm288, %v285, 0
        %v296 = vsel %vm288, %v286, 0
        %v299 = vsel %vm288, %v287, 0
        %vm301 = vcmask 1041408
        %v303 = vsel %vm301, %v275, 0
        %305 = vmatpush.bf16.msra.mxu0 0
        %306 = vmatpush.bf16.msra.mxu0 0
        %307 = vmatpush.bf16.msra.mxu0 0
        %308 = vmatpush.bf16.msra.mxu0 0
        %309 = vmatpush.bf16.msra.mxu0 0
        %310 = vmatpush.bf16.msra.mxu0 0
        %311 = vmatpush.bf16.msra.mxu0 0
        %312 = vmatpush.bf16.msra.mxu0 %v303
        %313 = vmatmul.bf16.gmra.mxu0 %v290
        %v314 = vpop.f32.mrf.mxu0
        %v315 = vadd.f32 0.0, %v314
        %v316 = vpop.f32.mrf.mxu0
        %v317 = vadd.f32 0.0, %v316
        %318 = vmatmul.bf16.gmra.mxu0 %v293
        %v319 = vpop.f32.mrf.mxu0
        %v320 = vadd.f32 0.0, %v319
        %v321 = vpop.f32.mrf.mxu0
        %v322 = vadd.f32 0.0, %v321
        %323 = vmatmul.bf16.gmra.mxu0 %v296
        %v324 = vpop.f32.mrf.mxu0
        %v325 = vadd.f32 0.0, %v324
        %v326 = vpop.f32.mrf.mxu0
        %v327 = vadd.f32 0.0, %v326
        %328 = vmatmul.bf16.gmra.mxu0 %v299
        %v329 = vpop.f32.mrf.mxu0
        %v330 = vadd.f32 0.0, %v329
        %v331 = vpop.f32.mrf.mxu0
        %v332 = vadd.f32 0.0, %v331
        %333 = vdwg.mxu0
        %v342 = vunpack.c.l.b16 %v162
        %v343 = vunpack.c.l.b16 %v163
        %v344 = vunpack.c.l.b16 %v165
        %v345 = vunpack.c.l.b16 %v166
        %v346 = vunpack.c.l.b16 %v168
        %v347 = vunpack.c.l.b16 %v169
        %v348 = vunpack.c.l.b16 %v171
        %v349 = vunpack.c.l.b16 %v172
        %v350 = vpack.c.b16 %v343, %v342
        %v351 = vpack.c.b16 %v345, %v344
        %v352 = vpack.c.b16 %v347, %v346
        %v353 = vpack.c.b16 %v349, %v348
        %v355 = vsel %vm288, %v350, 0
        %v358 = vsel %vm288, %v351, 0
        %v361 = vsel %vm288, %v352, 0
        %v364 = vsel %vm288, %v353, 0
        %v367 = vsel %vm301, %v174, 0
        %369 = vmatpush.bf16.msra.mxu0 0
        %370 = vmatpush.bf16.msra.mxu0 0
        %371 = vmatpush.bf16.msra.mxu0 0
        %372 = vmatpush.bf16.msra.mxu0 0
        %373 = vmatpush.bf16.msra.mxu0 0
        %374 = vmatpush.bf16.msra.mxu0 0
        %375 = vmatpush.bf16.msra.mxu0 0
        %376 = vmatpush.bf16.msra.mxu0 %v367
        %377 = vmatmul.bf16.gmra.mxu0 %v355
        %v378 = vpop.f32.mrf.mxu0
        %v379 = vadd.f32 %v315, %v378
        %v380 = vpop.f32.mrf.mxu0
        %v381 = vadd.f32 %v317, %v380
        %382 = vmatmul.bf16.gmra.mxu0 %v358
        %v383 = vpop.f32.mrf.mxu0
        %v384 = vadd.f32 %v320, %v383
        %v385 = vpop.f32.mrf.mxu0
        %v386 = vadd.f32 %v322, %v385
        %387 = vmatmul.bf16.gmra.mxu0 %v361
        %v388 = vpop.f32.mrf.mxu0
        %v389 = vadd.f32 %v325, %v388
        %v390 = vpop.f32.mrf.mxu0
        %v391 = vadd.f32 %v327, %v390
        %392 = vmatmul.bf16.gmra.mxu0 %v364
        %v393 = vpop.f32.mrf.mxu0
        %v394 = vadd.f32 %v330, %v393
        %v395 = vpop.f32.mrf.mxu0
        %v396 = vadd.f32 %v332, %v395
        %397 = vdwg.mxu0
        %vm402 = vcmask 1042432
        %vm403 = vcmask 1046532
        %vm404 = vmor %vm402, %vm403
        %v405 = vrot.slane %v162, 5
        %v406 = vrot.slane %v405, 4
        %v407 = vrot.slane %v163, 5
        %v408 = vsel %vm404, %v406, %v407
        %v409 = vrot.slane %v407, 4
        %v410 = vrot.slane %v164, 5
        %v411 = vsel %vm404, %v409, %v410
        %v412 = vrot.slane %v165, 5
        %v413 = vrot.slane %v412, 4
        %v414 = vrot.slane %v166, 5
        %v415 = vsel %vm404, %v413, %v414
        %v416 = vrot.slane %v414, 4
        %v417 = vrot.slane %v167, 5
        %v418 = vsel %vm404, %v416, %v417
        %v419 = vrot.slane %v168, 5
        %v420 = vrot.slane %v419, 4
        %v421 = vrot.slane %v169, 5
        %v422 = vsel %vm404, %v420, %v421
        %v423 = vrot.slane %v421, 4
        %v424 = vrot.slane %v170, 5
        %v425 = vsel %vm404, %v423, %v424
        %v426 = vrot.slane %v171, 5
        %v427 = vrot.slane %v426, 4
        %v428 = vrot.slane %v172, 5
        %v429 = vsel %vm404, %v427, %v428
        %v430 = vrot.slane %v428, 4
        %v431 = vrot.slane %v173, 5
        %v432 = vsel %vm404, %v430, %v431
        %s433 = scalar_lea.vmem %s1, 4
        %v434 = vld [vmem:[%s433] sm:$0x3]
        %v435 = vunpack.c.l.b16 %v408
        %v436 = vunpack.c.l.b16 %v411
        %v437 = vunpack.c.l.b16 %v415
        %v438 = vunpack.c.l.b16 %v418
        %v439 = vunpack.c.l.b16 %v422
        %v440 = vunpack.c.l.b16 %v425
        %v441 = vunpack.c.l.b16 %v429
        %v442 = vunpack.c.l.b16 %v432
        %v443 = vpack.c.b16 %v436, %v435
        %v444 = vpack.c.b16 %v438, %v437
        %v445 = vpack.c.b16 %v440, %v439
        %v446 = vpack.c.b16 %v442, %v441
        %v448 = vsel %vm288, %v443, 0
        %v451 = vsel %vm288, %v444, 0
        %v454 = vsel %vm288, %v445, 0
        %v457 = vsel %vm288, %v446, 0
        %v460 = vsel %vm301, %v434, 0
        %462 = vmatpush.bf16.msra.mxu0 0
        %463 = vmatpush.bf16.msra.mxu0 0
        %464 = vmatpush.bf16.msra.mxu0 0
        %465 = vmatpush.bf16.msra.mxu0 0
        %466 = vmatpush.bf16.msra.mxu0 0
        %467 = vmatpush.bf16.msra.mxu0 0
        %468 = vmatpush.bf16.msra.mxu0 0
        %469 = vmatpush.bf16.msra.mxu0 %v460
        %470 = vmatmul.bf16.gmra.mxu0 %v448
        %v471 = vpop.f32.mrf.mxu0
        %v472 = vadd.f32 0.0, %v471
        %v473 = vpop.f32.mrf.mxu0
        %v474 = vadd.f32 0.0, %v473
        %475 = vmatmul.bf16.gmra.mxu0 %v451
        %v476 = vpop.f32.mrf.mxu0
        %v477 = vadd.f32 0.0, %v476
        %v478 = vpop.f32.mrf.mxu0
        %v479 = vadd.f32 0.0, %v478
        %480 = vmatmul.bf16.gmra.mxu0 %v454
        %v481 = vpop.f32.mrf.mxu0
        %v482 = vadd.f32 0.0, %v481
        %v483 = vpop.f32.mrf.mxu0
        %v484 = vadd.f32 0.0, %v483
        %485 = vmatmul.bf16.gmra.mxu0 %v457
        %v486 = vpop.f32.mrf.mxu0
        %v487 = vadd.f32 0.0, %v486
        %v488 = vpop.f32.mrf.mxu0
        %v489 = vadd.f32 0.0, %v488
        %490 = vdwg.mxu0
        %v491 = vadd.f32 %v379, %v472
        %v492 = vadd.f32 %v381, %v474
        %v493 = vadd.f32 %v384, %v477
        %v494 = vadd.f32 %v386, %v479
        %v495 = vadd.f32 %v389, %v482
        %v496 = vadd.f32 %v391, %v484
        %v497 = vadd.f32 %v394, %v487
        %v498 = vadd.f32 %v396, %v489
        %s499 = sadd.s32 %s158, 1
        %s500 = smul.u32 %s499, 3
        %s501 = smul.addr %s500, 4
        %s502 = scalar_lea.vmem %s155, %s501
        %v503 = vld [vmem:[%s502] sm:$0xf]
        %v504 = vld [vmem:[%s502 + $0x4] sm:$0xf]
        %v505 = vld [vmem:[%s502 + $0x8] sm:$0x1]
        %v506 = vld [vmem:[%s502 + $0xc] sm:$0xf]
        %v507 = vld [vmem:[%s502 + $0x10] sm:$0xf]
        %v508 = vld [vmem:[%s502 + $0x14] sm:$0x1]
        %v509 = vld [vmem:[%s502 + $0x18] sm:$0xf]
        %v510 = vld [vmem:[%s502 + $0x1c] sm:$0xf]
        %v511 = vld [vmem:[%s502 + $0x20] sm:$0x1]
        %v512 = vld [vmem:[%s502 + $0x24] sm:$0xf]
        %v513 = vld [vmem:[%s502 + $0x28] sm:$0xf]
        %v514 = vld [vmem:[%s502 + $0x2c] sm:$0x1]
        %s515 = scalar_lea.vmem %s1, 6
        %v516 = vld [vmem:[%s515] sm:$0x3]
        %v525 = vunpack.c.l.b16 %v503
        %v526 = vunpack.c.l.b16 %v504
        %v527 = vunpack.c.l.b16 %v506
        %v528 = vunpack.c.l.b16 %v507
        %v529 = vunpack.c.l.b16 %v509
        %v530 = vunpack.c.l.b16 %v510
        %v531 = vunpack.c.l.b16 %v512
        %v532 = vunpack.c.l.b16 %v513
        %v533 = vpack.c.b16 %v526, %v525
        %v534 = vpack.c.b16 %v528, %v527
        %v535 = vpack.c.b16 %v530, %v529
        %v536 = vpack.c.b16 %v532, %v531
        %v538 = vsel %vm288, %v533, 0
        %v541 = vsel %vm288, %v534, 0
        %v544 = vsel %vm288, %v535, 0
        %v547 = vsel %vm288, %v536, 0
        %v550 = vsel %vm301, %v516, 0
        %552 = vmatpush.bf16.msra.mxu0 0
        %553 = vmatpush.bf16.msra.mxu0 0
        %554 = vmatpush.bf16.msra.mxu0 0
        %555 = vmatpush.bf16.msra.mxu0 0
        %556 = vmatpush.bf16.msra.mxu0 0
        %557 = vmatpush.bf16.msra.mxu0 0
        %558 = vmatpush.bf16.msra.mxu0 0
        %559 = vmatpush.bf16.msra.mxu0 %v550
        %560 = vmatmul.bf16.gmra.mxu0 %v538
        %v561 = vpop.f32.mrf.mxu0
        %v562 = vadd.f32 0.0, %v561
        %v563 = vpop.f32.mrf.mxu0
        %v564 = vadd.f32 0.0, %v563
        %565 = vmatmul.bf16.gmra.mxu0 %v541
        %v566 = vpop.f32.mrf.mxu0
        %v567 = vadd.f32 0.0, %v566
        %v568 = vpop.f32.mrf.mxu0
        %v569 = vadd.f32 0.0, %v568
        %570 = vmatmul.bf16.gmra.mxu0 %v544
        %v571 = vpop.f32.mrf.mxu0
        %v572 = vadd.f32 0.0, %v571
        %v573 = vpop.f32.mrf.mxu0
        %v574 = vadd.f32 0.0, %v573
        %575 = vmatmul.bf16.gmra.mxu0 %v547
        %v576 = vpop.f32.mrf.mxu0
        %v577 = vadd.f32 0.0, %v576
        %v578 = vpop.f32.mrf.mxu0
        %v579 = vadd.f32 0.0, %v578
        %580 = vdwg.mxu0
        %v581 = vadd.f32 %v491, %v562
        %v582 = vadd.f32 %v492, %v564
        %v583 = vadd.f32 %v493, %v567
        %v584 = vadd.f32 %v494, %v569
        %v585 = vadd.f32 %v495, %v572
        %v586 = vadd.f32 %v496, %v574
        %v587 = vadd.f32 %v497, %v577
        %v588 = vadd.f32 %v498, %v579
        %v590 = vshrl.u32 %v503, 16
        %v592 = vrot.slane %v590, 4
        %v593 = vshll.u32 %v503, 16
        %v595 = vrot.slane %v593, 5
        %v596 = vor.u32 %v592, %v595
        %v597 = vrot.slane %v596, 4
        %v599 = vshll.u32 %v504, 16
        %v601 = vrot.slane %v599, 5
        %v602 = vsel %vm177, %v597, %v601
        %v603 = vshrl.u32 %v504, 16
        %v605 = vrot.slane %v603, 4
        %v606 = vor.u32 %v605, %v601
        %v607 = vrot.slane %v606, 4
        %v609 = vshll.u32 %v505, 16
        %v611 = vrot.slane %v609, 5
        %v612 = vsel %vm177, %v607, %v611
        %v614 = vshrl.u32 %v506, 16
        %v616 = vrot.slane %v614, 4
        %v617 = vshll.u32 %v506, 16
        %v619 = vrot.slane %v617, 5
        %v620 = vor.u32 %v616, %v619
        %v621 = vrot.slane %v620, 4
        %v623 = vshll.u32 %v507, 16
        %v625 = vrot.slane %v623, 5
        %v626 = vsel %vm177, %v621, %v625
        %v627 = vshrl.u32 %v507, 16
        %v629 = vrot.slane %v627, 4
        %v630 = vor.u32 %v629, %v625
        %v631 = vrot.slane %v630, 4
        %v633 = vshll.u32 %v508, 16
        %v635 = vrot.slane %v633, 5
        %v636 = vsel %vm177, %v631, %v635
        %v638 = vshrl.u32 %v509, 16
        %v640 = vrot.slane %v638, 4
        %v641 = vshll.u32 %v509, 16
        %v643 = vrot.slane %v641, 5
        %v644 = vor.u32 %v640, %v643
        %v645 = vrot.slane %v644, 4
        %v647 = vshll.u32 %v510, 16
        %v649 = vrot.slane %v647, 5
        %v650 = vsel %vm177, %v645, %v649
        %v651 = vshrl.u32 %v510, 16
        %v653 = vrot.slane %v651, 4
        %v654 = vor.u32 %v653, %v649
        %v655 = vrot.slane %v654, 4
        %v657 = vshll.u32 %v511, 16
        %v659 = vrot.slane %v657, 5
        %v660 = vsel %vm177, %v655, %v659
        %v662 = vshrl.u32 %v512, 16
        %v664 = vrot.slane %v662, 4
        %v665 = vshll.u32 %v512, 16
        %v667 = vrot.slane %v665, 5
        %v668 = vor.u32 %v664, %v667
        %v669 = vrot.slane %v668, 4
        %v671 = vshll.u32 %v513, 16
        %v673 = vrot.slane %v671, 5
        %v674 = vsel %vm177, %v669, %v673
        %v675 = vshrl.u32 %v513, 16
        %v677 = vrot.slane %v675, 4
        %v678 = vor.u32 %v677, %v673
        %v679 = vrot.slane %v678, 4
        %v681 = vshll.u32 %v514, 16
        %v683 = vrot.slane %v681, 5
        %v684 = vsel %vm177, %v679, %v683
        %s685 = scalar_lea.vmem %s1, 8
        %v686 = vld [vmem:[%s685] sm:$0x3]
        %v687 = vunpack.c.l.b16 %v602
        %v688 = vunpack.c.l.b16 %v612
        %v689 = vunpack.c.l.b16 %v626
        %v690 = vunpack.c.l.b16 %v636
        %v691 = vunpack.c.l.b16 %v650
        %v692 = vunpack.c.l.b16 %v660
        %v693 = vunpack.c.l.b16 %v674
        %v694 = vunpack.c.l.b16 %v684
        %v695 = vpack.c.b16 %v688, %v687
        %v696 = vpack.c.b16 %v690, %v689
        %v697 = vpack.c.b16 %v692, %v691
        %v698 = vpack.c.b16 %v694, %v693
        %v700 = vsel %vm288, %v695, 0
        %v703 = vsel %vm288, %v696, 0
        %v706 = vsel %vm288, %v697, 0
        %v709 = vsel %vm288, %v698, 0
        %v712 = vsel %vm301, %v686, 0
        %714 = vmatpush.bf16.msra.mxu0 0
        %715 = vmatpush.bf16.msra.mxu0 0
        %716 = vmatpush.bf16.msra.mxu0 0
        %717 = vmatpush.bf16.msra.mxu0 0
        %718 = vmatpush.bf16.msra.mxu0 0
        %719 = vmatpush.bf16.msra.mxu0 0
        %720 = vmatpush.bf16.msra.mxu0 0
        %721 = vmatpush.bf16.msra.mxu0 %v712
        %722 = vmatmul.bf16.gmra.mxu0 %v700
        %v723 = vpop.f32.mrf.mxu0
        %v724 = vadd.f32 0.0, %v723
        %v725 = vpop.f32.mrf.mxu0
        %v726 = vadd.f32 0.0, %v725
        %727 = vmatmul.bf16.gmra.mxu0 %v703
        %v728 = vpop.f32.mrf.mxu0
        %v729 = vadd.f32 0.0, %v728
        %v730 = vpop.f32.mrf.mxu0
        %v731 = vadd.f32 0.0, %v730
        %732 = vmatmul.bf16.gmra.mxu0 %v706
        %v733 = vpop.f32.mrf.mxu0
        %v734 = vadd.f32 0.0, %v733
        %v735 = vpop.f32.mrf.mxu0
        %v736 = vadd.f32 0.0, %v735
        %737 = vmatmul.bf16.gmra.mxu0 %v709
        %v738 = vpop.f32.mrf.mxu0
        %v739 = vadd.f32 0.0, %v738
        %v740 = vpop.f32.mrf.mxu0
        %v741 = vadd.f32 0.0, %v740
        %742 = vdwg.mxu0
        %v743 = vadd.f32 %v581, %v724
        %v744 = vadd.f32 %v582, %v726
        %v745 = vadd.f32 %v583, %v729
        %v746 = vadd.f32 %v584, %v731
        %v747 = vadd.f32 %v585, %v734
        %v748 = vadd.f32 %v586, %v736
        %v749 = vadd.f32 %v587, %v739
        %v750 = vadd.f32 %v588, %v741
        %v755 = vrot.slane %v503, 5
        %v756 = vrot.slane %v755, 4
        %v757 = vrot.slane %v504, 5
        %v758 = vsel %vm404, %v756, %v757
        %v759 = vrot.slane %v757, 4
        %v760 = vrot.slane %v505, 5
        %v761 = vsel %vm404, %v759, %v760
        %v762 = vrot.slane %v506, 5
        %v763 = vrot.slane %v762, 4
        %v764 = vrot.slane %v507, 5
        %v765 = vsel %vm404, %v763, %v764
        %v766 = vrot.slane %v764, 4
        %v767 = vrot.slane %v508, 5
        %v768 = vsel %vm404, %v766, %v767
        %v769 = vrot.slane %v509, 5
        %v770 = vrot.slane %v769, 4
        %v771 = vrot.slane %v510, 5
        %v772 = vsel %vm404, %v770, %v771
        %v773 = vrot.slane %v771, 4
        %v774 = vrot.slane %v511, 5
        %v775 = vsel %vm404, %v773, %v774
        %v776 = vrot.slane %v512, 5
        %v777 = vrot.slane %v776, 4
        %v778 = vrot.slane %v513, 5
        %v779 = vsel %vm404, %v777, %v778
        %v780 = vrot.slane %v778, 4
        %v781 = vrot.slane %v514, 5
        %v782 = vsel %vm404, %v780, %v781
        %s783 = scalar_lea.vmem %s1, 10
        %v784 = vld [vmem:[%s783] sm:$0x3]
        %v785 = vunpack.c.l.b16 %v758
        %v786 = vunpack.c.l.b16 %v761
        %v787 = vunpack.c.l.b16 %v765
        %v788 = vunpack.c.l.b16 %v768
        %v789 = vunpack.c.l.b16 %v772
        %v790 = vunpack.c.l.b16 %v775
        %v791 = vunpack.c.l.b16 %v779
        %v792 = vunpack.c.l.b16 %v782
        %v793 = vpack.c.b16 %v786, %v785
        %v794 = vpack.c.b16 %v788, %v787
        %v795 = vpack.c.b16 %v790, %v789
        %v796 = vpack.c.b16 %v792, %v791
        %v798 = vsel %vm288, %v793, 0
        %v801 = vsel %vm288, %v794, 0
        %v804 = vsel %vm288, %v795, 0
        %v807 = vsel %vm288, %v796, 0
        %v810 = vsel %vm301, %v784, 0
        %812 = vmatpush.bf16.msra.mxu0 0
        %813 = vmatpush.bf16.msra.mxu0 0
        %814 = vmatpush.bf16.msra.mxu0 0
        %815 = vmatpush.bf16.msra.mxu0 0
        %816 = vmatpush.bf16.msra.mxu0 0
        %817 = vmatpush.bf16.msra.mxu0 0
        %818 = vmatpush.bf16.msra.mxu0 0
        %819 = vmatpush.bf16.msra.mxu0 %v810
        %820 = vmatmul.bf16.gmra.mxu0 %v798
        %v821 = vpop.f32.mrf.mxu0
        %v822 = vadd.f32 0.0, %v821
        %v823 = vpop.f32.mrf.mxu0
        %v824 = vadd.f32 0.0, %v823
        %825 = vmatmul.bf16.gmra.mxu0 %v801
        %v826 = vpop.f32.mrf.mxu0
        %v827 = vadd.f32 0.0, %v826
        %v828 = vpop.f32.mrf.mxu0
        %v829 = vadd.f32 0.0, %v828
        %830 = vmatmul.bf16.gmra.mxu0 %v804
        %v831 = vpop.f32.mrf.mxu0
        %v832 = vadd.f32 0.0, %v831
        %v833 = vpop.f32.mrf.mxu0
        %v834 = vadd.f32 0.0, %v833
        %835 = vmatmul.bf16.gmra.mxu0 %v807
        %v836 = vpop.f32.mrf.mxu0
        %v837 = vadd.f32 0.0, %v836
        %v838 = vpop.f32.mrf.mxu0
        %v839 = vadd.f32 0.0, %v838
        %840 = vdwg.mxu0
        %v841 = vadd.f32 %v743, %v822
        %v842 = vadd.f32 %v744, %v824
        %v843 = vadd.f32 %v745, %v827
        %v844 = vadd.f32 %v746, %v829
        %v845 = vadd.f32 %v747, %v832
        %v846 = vadd.f32 %v748, %v834
        %v847 = vadd.f32 %v749, %v837
        %v848 = vadd.f32 %v750, %v839
        %s849 = sadd.s32 %s158, 2
        %s850 = smul.u32 %s849, 3
        %s851 = smul.addr %s850, 4
        %s852 = scalar_lea.vmem %s155, %s851
        %v853 = vld [vmem:[%s852] sm:$0xf]
        %v854 = vld [vmem:[%s852 + $0x4] sm:$0xf]
        %v855 = vld [vmem:[%s852 + $0x8] sm:$0x1]
        %v856 = vld [vmem:[%s852 + $0xc] sm:$0xf]
        %v857 = vld [vmem:[%s852 + $0x10] sm:$0xf]
        %v858 = vld [vmem:[%s852 + $0x14] sm:$0x1]
        %v859 = vld [vmem:[%s852 + $0x18] sm:$0xf]
        %v860 = vld [vmem:[%s852 + $0x1c] sm:$0xf]
        %v861 = vld [vmem:[%s852 + $0x20] sm:$0x1]
        %v862 = vld [vmem:[%s852 + $0x24] sm:$0xf]
        %v863 = vld [vmem:[%s852 + $0x28] sm:$0xf]
        %v864 = vld [vmem:[%s852 + $0x2c] sm:$0x1]
        %s865 = scalar_lea.vmem %s1, 12
        %v866 = vld [vmem:[%s865] sm:$0x3]
        %v875 = vunpack.c.l.b16 %v853
        %v876 = vunpack.c.l.b16 %v854
        %v877 = vunpack.c.l.b16 %v856
        %v878 = vunpack.c.l.b16 %v857
        %v879 = vunpack.c.l.b16 %v859
        %v880 = vunpack.c.l.b16 %v860
        %v881 = vunpack.c.l.b16 %v862
        %v882 = vunpack.c.l.b16 %v863
        %v883 = vpack.c.b16 %v876, %v875
        %v884 = vpack.c.b16 %v878, %v877
        %v885 = vpack.c.b16 %v880, %v879
        %v886 = vpack.c.b16 %v882, %v881
        %v888 = vsel %vm288, %v883, 0
        %v891 = vsel %vm288, %v884, 0
        %v894 = vsel %vm288, %v885, 0
        %v897 = vsel %vm288, %v886, 0
        %v900 = vsel %vm301, %v866, 0
        %902 = vmatpush.bf16.msra.mxu0 0
        %903 = vmatpush.bf16.msra.mxu0 0
        %904 = vmatpush.bf16.msra.mxu0 0
        %905 = vmatpush.bf16.msra.mxu0 0
        %906 = vmatpush.bf16.msra.mxu0 0
        %907 = vmatpush.bf16.msra.mxu0 0
        %908 = vmatpush.bf16.msra.mxu0 0
        %909 = vmatpush.bf16.msra.mxu0 %v900
        %910 = vmatmul.bf16.gmra.mxu0 %v888
        %v911 = vpop.f32.mrf.mxu0
        %v912 = vadd.f32 0.0, %v911
        %v913 = vpop.f32.mrf.mxu0
        %v914 = vadd.f32 0.0, %v913
        %915 = vmatmul.bf16.gmra.mxu0 %v891
        %v916 = vpop.f32.mrf.mxu0
        %v917 = vadd.f32 0.0, %v916
        %v918 = vpop.f32.mrf.mxu0
        %v919 = vadd.f32 0.0, %v918
        %920 = vmatmul.bf16.gmra.mxu0 %v894
        %v921 = vpop.f32.mrf.mxu0
        %v922 = vadd.f32 0.0, %v921
        %v923 = vpop.f32.mrf.mxu0
        %v924 = vadd.f32 0.0, %v923
        %925 = vmatmul.bf16.gmra.mxu0 %v897
        %v926 = vpop.f32.mrf.mxu0
        %v927 = vadd.f32 0.0, %v926
        %v928 = vpop.f32.mrf.mxu0
        %v929 = vadd.f32 0.0, %v928
        %930 = vdwg.mxu0
        %v931 = vadd.f32 %v841, %v912
        %v932 = vadd.f32 %v842, %v914
        %v933 = vadd.f32 %v843, %v917
        %v934 = vadd.f32 %v844, %v919
        %v935 = vadd.f32 %v845, %v922
        %v936 = vadd.f32 %v846, %v924
        %v937 = vadd.f32 %v847, %v927
        %v938 = vadd.f32 %v848, %v929
        %v940 = vshrl.u32 %v853, 16
        %v942 = vrot.slane %v940, 4
        %v943 = vshll.u32 %v853, 16
        %v945 = vrot.slane %v943, 5
        %v946 = vor.u32 %v942, %v945
        %v947 = vrot.slane %v946, 4
        %v949 = vshll.u32 %v854, 16
        %v951 = vrot.slane %v949, 5
        %v952 = vsel %vm177, %v947, %v951
        %v953 = vshrl.u32 %v854, 16
        %v955 = vrot.slane %v953, 4
        %v956 = vor.u32 %v955, %v951
        %v957 = vrot.slane %v956, 4
        %v959 = vshll.u32 %v855, 16
        %v961 = vrot.slane %v959, 5
        %v962 = vsel %vm177, %v957, %v961
        %v964 = vshrl.u32 %v856, 16
        %v966 = vrot.slane %v964, 4
        %v967 = vshll.u32 %v856, 16
        %v969 = vrot.slane %v967, 5
        %v970 = vor.u32 %v966, %v969
        %v971 = vrot.slane %v970, 4
        %v973 = vshll.u32 %v857, 16
        %v975 = vrot.slane %v973, 5
        %v976 = vsel %vm177, %v971, %v975
        %v977 = vshrl.u32 %v857, 16
        %v979 = vrot.slane %v977, 4
        %v980 = vor.u32 %v979, %v975
        %v981 = vrot.slane %v980, 4
        %v983 = vshll.u32 %v858, 16
        %v985 = vrot.slane %v983, 5
        %v986 = vsel %vm177, %v981, %v985
        %v988 = vshrl.u32 %v859, 16
        %v990 = vrot.slane %v988, 4
        %v991 = vshll.u32 %v859, 16
        %v993 = vrot.slane %v991, 5
        %v994 = vor.u32 %v990, %v993
        %v995 = vrot.slane %v994, 4
        %v997 = vshll.u32 %v860, 16
        %v999 = vrot.slane %v997, 5
        %v1000 = vsel %vm177, %v995, %v999
        %v1001 = vshrl.u32 %v860, 16
        %v1003 = vrot.slane %v1001, 4
        %v1004 = vor.u32 %v1003, %v999
        %v1005 = vrot.slane %v1004, 4
        %v1007 = vshll.u32 %v861, 16
        %v1009 = vrot.slane %v1007, 5
        %v1010 = vsel %vm177, %v1005, %v1009
        %v1012 = vshrl.u32 %v862, 16
        %v1014 = vrot.slane %v1012, 4
        %v1015 = vshll.u32 %v862, 16
        %v1017 = vrot.slane %v1015, 5
        %v1018 = vor.u32 %v1014, %v1017
        %v1019 = vrot.slane %v1018, 4
        %v1021 = vshll.u32 %v863, 16
        %v1023 = vrot.slane %v1021, 5
        %v1024 = vsel %vm177, %v1019, %v1023
        %v1025 = vshrl.u32 %v863, 16
        %v1027 = vrot.slane %v1025, 4
        %v1028 = vor.u32 %v1027, %v1023
        %v1029 = vrot.slane %v1028, 4
        %v1031 = vshll.u32 %v864, 16
        %v1033 = vrot.slane %v1031, 5
        %v1034 = vsel %vm177, %v1029, %v1033
        %s1035 = scalar_lea.vmem %s1, 14
        %v1036 = vld [vmem:[%s1035] sm:$0x3]
        %v1037 = vunpack.c.l.b16 %v952
        %v1038 = vunpack.c.l.b16 %v962
        %v1039 = vunpack.c.l.b16 %v976
        %v1040 = vunpack.c.l.b16 %v986
        %v1041 = vunpack.c.l.b16 %v1000
        %v1042 = vunpack.c.l.b16 %v1010
        %v1043 = vunpack.c.l.b16 %v1024
        %v1044 = vunpack.c.l.b16 %v1034
        %v1045 = vpack.c.b16 %v1038, %v1037
        %v1046 = vpack.c.b16 %v1040, %v1039
        %v1047 = vpack.c.b16 %v1042, %v1041
        %v1048 = vpack.c.b16 %v1044, %v1043
        %v1050 = vsel %vm288, %v1045, 0
        %v1053 = vsel %vm288, %v1046, 0
        %v1056 = vsel %vm288, %v1047, 0
        %v1059 = vsel %vm288, %v1048, 0
        %v1062 = vsel %vm301, %v1036, 0
        %1064 = vmatpush.bf16.msra.mxu0 0
        %1065 = vmatpush.bf16.msra.mxu0 0
        %1066 = vmatpush.bf16.msra.mxu0 0
        %1067 = vmatpush.bf16.msra.mxu0 0
        %1068 = vmatpush.bf16.msra.mxu0 0
        %1069 = vmatpush.bf16.msra.mxu0 0
        %1070 = vmatpush.bf16.msra.mxu0 0
        %1071 = vmatpush.bf16.msra.mxu0 %v1062
        %1072 = vmatmul.bf16.gmra.mxu0 %v1050
        %v1073 = vpop.f32.mrf.mxu0
        %v1074 = vadd.f32 0.0, %v1073
        %v1075 = vpop.f32.mrf.mxu0
        %v1076 = vadd.f32 0.0, %v1075
        %1077 = vmatmul.bf16.gmra.mxu0 %v1053
        %v1078 = vpop.f32.mrf.mxu0
        %v1079 = vadd.f32 0.0, %v1078
        %v1080 = vpop.f32.mrf.mxu0
        %v1081 = vadd.f32 0.0, %v1080
        %1082 = vmatmul.bf16.gmra.mxu0 %v1056
        %v1083 = vpop.f32.mrf.mxu0
        %v1084 = vadd.f32 0.0, %v1083
        %v1085 = vpop.f32.mrf.mxu0
        %v1086 = vadd.f32 0.0, %v1085
        %1087 = vmatmul.bf16.gmra.mxu0 %v1059
        %v1088 = vpop.f32.mrf.mxu0
        %v1089 = vadd.f32 0.0, %v1088
        %v1090 = vpop.f32.mrf.mxu0
        %v1091 = vadd.f32 0.0, %v1090
        %1092 = vdwg.mxu0
        %v1093 = vadd.f32 %v931, %v1074
        %v1094 = vadd.f32 %v932, %v1076
        %v1095 = vadd.f32 %v933, %v1079
        %v1096 = vadd.f32 %v934, %v1081
        %v1097 = vadd.f32 %v935, %v1084
        %v1098 = vadd.f32 %v936, %v1086
        %v1099 = vadd.f32 %v937, %v1089
        %v1100 = vadd.f32 %v938, %v1091
        %v1105 = vrot.slane %v853, 5
        %v1106 = vrot.slane %v1105, 4
        %v1107 = vrot.slane %v854, 5
        %v1108 = vsel %vm404, %v1106, %v1107
        %v1109 = vrot.slane %v1107, 4
        %v1110 = vrot.slane %v855, 5
        %v1111 = vsel %vm404, %v1109, %v1110
        %v1112 = vrot.slane %v856, 5
        %v1113 = vrot.slane %v1112, 4
        %v1114 = vrot.slane %v857, 5
        %v1115 = vsel %vm404, %v1113, %v1114
        %v1116 = vrot.slane %v1114, 4
        %v1117 = vrot.slane %v858, 5
        %v1118 = vsel %vm404, %v1116, %v1117
        %v1119 = vrot.slane %v859, 5
        %v1120 = vrot.slane %v1119, 4
        %v1121 = vrot.slane %v860, 5
        %v1122 = vsel %vm404, %v1120, %v1121
        %v1123 = vrot.slane %v1121, 4
        %v1124 = vrot.slane %v861, 5
        %v1125 = vsel %vm404, %v1123, %v1124
        %v1126 = vrot.slane %v862, 5
        %v1127 = vrot.slane %v1126, 4
        %v1128 = vrot.slane %v863, 5
        %v1129 = vsel %vm404, %v1127, %v1128
        %v1130 = vrot.slane %v1128, 4
        %v1131 = vrot.slane %v864, 5
        %v1132 = vsel %vm404, %v1130, %v1131
        %s1133 = scalar_lea.vmem %s1, 16
        %v1134 = vld [vmem:[%s1133] sm:$0x3]
        %v1135 = vunpack.c.l.b16 %v1108
        %v1136 = vunpack.c.l.b16 %v1111
        %v1137 = vunpack.c.l.b16 %v1115
        %v1138 = vunpack.c.l.b16 %v1118
        %v1139 = vunpack.c.l.b16 %v1122
        %v1140 = vunpack.c.l.b16 %v1125
        %v1141 = vunpack.c.l.b16 %v1129
        %v1142 = vunpack.c.l.b16 %v1132
        %v1143 = vpack.c.b16 %v1136, %v1135
        %v1144 = vpack.c.b16 %v1138, %v1137
        %v1145 = vpack.c.b16 %v1140, %v1139
        %v1146 = vpack.c.b16 %v1142, %v1141
        %v1148 = vsel %vm288, %v1143, 0
        %v1151 = vsel %vm288, %v1144, 0
        %v1154 = vsel %vm288, %v1145, 0
        %v1157 = vsel %vm288, %v1146, 0
        %v1160 = vsel %vm301, %v1134, 0
        %1162 = vmatpush.bf16.msra.mxu0 0
        %1163 = vmatpush.bf16.msra.mxu0 0
        %1164 = vmatpush.bf16.msra.mxu0 0
        %1165 = vmatpush.bf16.msra.mxu0 0
        %1166 = vmatpush.bf16.msra.mxu0 0
        %1167 = vmatpush.bf16.msra.mxu0 0
        %1168 = vmatpush.bf16.msra.mxu0 0
        %1169 = vmatpush.bf16.msra.mxu0 %v1160
        %1170 = vmatmul.bf16.gmra.mxu0 %v1148
        %v1171 = vpop.f32.mrf.mxu0
        %v1172 = vadd.f32 0.0, %v1171
        %v1173 = vpop.f32.mrf.mxu0
        %v1174 = vadd.f32 0.0, %v1173
        %1175 = vmatmul.bf16.gmra.mxu0 %v1151
        %v1176 = vpop.f32.mrf.mxu0
        %v1177 = vadd.f32 0.0, %v1176
        %v1178 = vpop.f32.mrf.mxu0
        %v1179 = vadd.f32 0.0, %v1178
        %1180 = vmatmul.bf16.gmra.mxu0 %v1154
        %v1181 = vpop.f32.mrf.mxu0
        %v1182 = vadd.f32 0.0, %v1181
        %v1183 = vpop.f32.mrf.mxu0
        %v1184 = vadd.f32 0.0, %v1183
        %1185 = vmatmul.bf16.gmra.mxu0 %v1157
        %v1186 = vpop.f32.mrf.mxu0
        %v1187 = vadd.f32 0.0, %v1186
        %v1188 = vpop.f32.mrf.mxu0
        %v1189 = vadd.f32 0.0, %v1188
        %1190 = vdwg.mxu0
        %v1191 = vadd.f32 %v1093, %v1172
        %v1192 = vadd.f32 %v1094, %v1174
        %v1193 = vadd.f32 %v1095, %v1177
        %v1194 = vadd.f32 %v1096, %v1179
        %v1195 = vadd.f32 %v1097, %v1182
        %v1196 = vadd.f32 %v1098, %v1184
        %v1197 = vadd.f32 %v1099, %v1187
        %v1198 = vadd.f32 %v1100, %v1189
        %vm1199 = vcmask 261120
        %1200 = vst.msk [vmem:[%s150] sm:$0xff] %vm1199, %v1191
        %1201 = vst.msk [vmem:[%s150 + $0x8] sm:$0xff] %vm1199, %v1192
        %1202 = vst.msk [vmem:[%s150 + $0x10] sm:$0xff] %vm1199, %v1193
        %1203 = vst.msk [vmem:[%s150 + $0x18] sm:$0xff] %vm1199, %v1194
        %1204 = vst.msk [vmem:[%s150 + $0x20] sm:$0xff] %vm1199, %v1195
        %1205 = vst.msk [vmem:[%s150 + $0x28] sm:$0xff] %vm1199, %v1196
        %1206 = vst.msk [vmem:[%s150 + $0x30] sm:$0xff] %vm1199, %v1197
        %1207 = vst.msk [vmem:[%s150 + $0x38] sm:$0xff] %vm1199, %v1198
        %s1208 = sand.u32 %s85, 1
        %s1209 = scalar_lea.sflag [#allocation3], %s1208
        %s1210 = sand.u32 %s85, 1
        %s1211 = smul.addr %s1210, 64
        %s1212 = scalar_lea.vmem [#allocation2], %s1211
        // Predicated region
        $region29: #{basic_block_forward.1} parent=27 // pred_check
          %p1213 = pneg %p95
        $region30: #{basic_block_forward.1} parent=27 // pred_check_branch
          %1215 = sbr.rel (%p1213) target = $region32
        $region31: #{basic_block_forward.1} parent=27 // pred_region
          %s1216 = smul.u32 4, %s21
          %1218 = vsyncadd %s1209, 0
          %s1219 = smul.addr %s1216, 2
          %s1220 = smul.addr %s20, 32
          %s1221 = sadd.s32 %s1219, %s1220
          %s1222 = smul.addr %s1221, 8
          %s1223 = scalar_lea.hbm %s2, %s1222
          %s1224 = sshll.u32 %s1212, 4
          %s1225 = int_to_ptr.vmem [resolvable:$true] %s1224
          %s1226 = sshll.u32 %s1223, 4
          %s1227 = int_to_ptr.hbm [resolvable:$true] %s1226
          %1232 = dma.vmem_to_hbm [thread:$0]  %s1225, 1024, %s1227, %s1209, 128, 128, 8
        $region32: #{basic_block_forward.1} parent=27 // pred_fallthru
          _
      $region28: #{basic_block_forward.1} parent=5 // pred_fallthru
        _
      %p1233 = scmp.le.s32.totalorder 2, %s11
      // Predicated region
      $region33: #{basic_block_forward.1} parent=5 // pred_check
        %p1234 = pneg %p1233
      $region34: #{basic_block_forward.1} parent=5 // pred_check_branch
        %1236 = sbr.rel (%p1234) target = $region36
      $region35: #{basic_block_forward.1} parent=5 // pred_region
        %s1237 = ssub.s32 %s11, 2
        // Predicated region
        $region37: #{basic_block_forward.1} parent=35 // pred_check
          %p1238 = pneg %p101
        $region38: #{basic_block_forward.1} parent=35 // pred_check_branch
          %1240 = sbr.rel (%p1238) target = $region40
        $region39: #{basic_block_forward.1} parent=35 // pred_region
          %s1241 = sand.u32 %s86, 1
          %s1242 = scalar_lea.sflag [#allocation3], %s1241
          %s1243 = sand.u32 %s86, 1
          %s1244 = smul.addr %s1243, 64
          %s1245 = scalar_lea.vmem [#allocation2], %s1244
          %1247 = dma.done %s1242, 1024
        $region40: #{basic_block_forward.1} parent=35 // pred_fallthru
          _
      $region36: #{basic_block_forward.1} parent=5 // pred_fallthru
        _
    $region6: #{basic_block_forward.1} parent=1 // loop_footer
      %s15 = sadd.s32 1, %s11
    $region7: #{basic_block_forward.1} parent=1 // loop_footer_branch
      %10 = sbr.rel target = $region3
    $region8: #{basic_block_forward.1} parent=1 // loop_exit
      _
    %1248 = vsyncpa [#allocation3], 1
    %s1249 = scalar_lea.sflag [#allocation3], 1
    %1250 = vsyncpa %s1249, 1

</llo_original>
